<compile_context>
chip_gen: v7x
topology: tpu7x:2x2x1
jax: 0.10.0
libtpu: 0.0.40
codegen_flags: <defaults>
</compile_context>

<pallas_src>
import functools

import jax
import jax.numpy as jnp
from jax.experimental import pallas as pl
from jax.experimental.pallas import tpu as pltpu

NUM_FEATURES = 32   # stand-in for self.model.num_features
NUM_CLASSES = 6
_HEAD_PAD = 8       # pad head rows 6 -> 8 so head params / output stay (8,128)-friendly


def _round_up(x, m):
    return ((x + m - 1) // m) * m


# ----------------------------------------------------------------------------
# Glue: __reshape_input + conv pad + im2col, emitted directly in the kernel's
# transposed (B, 9, M) bf16 layout (taps on sublanes, spatial positions on lanes).
# ----------------------------------------------------------------------------
def _build_patches(x):
    B, H, W, C8 = x.shape
    assert C8 == 8
    Himg, Wimg = 4 * H, 2 * W                          # monotone image size
    Ho, Wo = Himg // 2, Wimg // 2                      # conv stride 2
    M = Ho * Wo

    xb = x.astype(jnp.bfloat16)
    # monotone image: img[b, i*H + h, s*W + w] = x[b, h, w, 4*s + i]
    img = xb.reshape(B, H, W, 2, 4)
    img = jnp.transpose(img, (0, 4, 1, 3, 2)).reshape(B, Himg, Wimg)
    imgp = jnp.pad(img, ((0, 0), (1, 1), (1, 1)))      # conv pad=1 (zeros)

    cols = [imgp[:, kh:kh + Himg:2, kw:kw + Wimg:2].reshape(B, M)
            for kh in range(3) for kw in range(3)]
    return jnp.stack(cols, axis=1), M                  # (B, 9, M) bf16


# ----------------------------------------------------------------------------
# Fused kernel: conv (MXU matmul) + bias + ReLU + global avg pool + Linear(32,6)
# One grid step per batch element — no accumulator, no mask, no per-step reduce.
# ----------------------------------------------------------------------------
def _fused_conv_pool_head_kernel(p_ref, cw_ref, cb_ref, hw_ref, hb_ref, out_ref,
                                 *, m_true, n_pad):
    # conv3x3/s2 as ONE MXU matmul over the whole spatial extent of this batch:
    # (C, 9) bf16 @ (9, M) bf16 -> (C, M) f32, lane-dense.
    act = jnp.dot(cw_ref[...], p_ref[0], preferred_element_type=jnp.float32)
    act = jnp.maximum(act + cb_ref[...], 0.0)                      # bias + ReLU

    # Global average pool: single reduction per batch (VALU vreg accumulation,
    # one final cross-lane stage — not in any steady-state loop).
    ch_sum = jnp.sum(act, axis=1, keepdims=True)                   # (C, 1)

    if n_pad:  # padded patch columns are exactly zero -> each contributes relu(bias)
        ch_sum = ch_sum - float(n_pad) * jnp.maximum(cb_ref[...], 0.0)

    pooled = ch_sum * (1.0 / float(m_true))                        # (C, 1)
    logits = jnp.dot(hw_ref[...], pooled,
                     preferred_element_type=jnp.float32) + hb_ref[...]   # (8, 1)
    out_ref[0] = jnp.broadcast_to(logits, out_ref.shape[1:])       # full-block store


# ----------------------------------------------------------------------------
# Forward
# ----------------------------------------------------------------------------
def init_params(key):
    k1, k2, k3, k4 = jax.random.split(key, 4)
    return {
        "conv_w": jax.random.normal(k1, (3, 3, 1, NUM_FEATURES), jnp.float32) * 0.1,
        "conv_b": jax.random.normal(k2, (NUM_FEATURES,), jnp.float32) * 0.01,
        # nn.Linear layout: (out_features, in_features)
        "head_w": jax.random.normal(k3, (NUM_CLASSES, NUM_FEATURES), jnp.float32) * 0.1,
        "head_b": jax.random.normal(k4, (NUM_CLASSES,), jnp.float32) * 0.01,
    }


@jax.jit
def custom_model_forward(x, params):
    B = x.shape[0]
    C = NUM_FEATURES

    patches, M = _build_patches(x)                     # (B, 9, M) bf16
    m_pad = _round_up(M, 128)                          # lane-align; ONE tile per batch
    if m_pad != M:
        patches = jnp.pad(patches, ((0, 0), (0, 0), (0, m_pad - M)))

    cw = params["conv_w"].reshape(9, C).T.astype(jnp.bfloat16)        # (C, 9)
    cb = params["conv_b"].reshape(C, 1).astype(jnp.float32)           # (C, 1)
    hw = jnp.zeros((_HEAD_PAD, C), jnp.float32).at[:NUM_CLASSES].set(
        params["head_w"].astype(jnp.float32))                         # (8, C)
    hb = jnp.zeros((_HEAD_PAD, 1), jnp.float32).at[:NUM_CLASSES, 0].set(
        params["head_b"].astype(jnp.float32))                         # (8, 1)

    kernel = functools.partial(_fused_conv_pool_head_kernel,
                               m_true=M, n_pad=m_pad - M)

    cost = pl.CostEstimate(
        flops=2 * B * C * 9 * m_pad + 2 * B * _HEAD_PAD * C,
        transcendentals=0,
        bytes_accessed=(B * 9 * m_pad * 2                 # patches (bf16)
                        + B * _HEAD_PAD * 128 * 4         # output slab
                        + (C * 9 + C + _HEAD_PAD * C + _HEAD_PAD) * 4),
    )

    out = pl.pallas_call(
        kernel,
        out_shape=jax.ShapeDtypeStruct((B, _HEAD_PAD, 128), jnp.float32),
        grid_spec=pltpu.PrefetchScalarGridSpec(
            num_scalar_prefetch=0,
            grid=(B,),                                               # one step / batch
            in_specs=[
                pl.BlockSpec((1, 9, m_pad), lambda b: (b, 0, 0)),    # patches
                pl.BlockSpec((C, 9), lambda b: (0, 0)),              # conv weight
                pl.BlockSpec((C, 1), lambda b: (0, 0)),              # conv bias
                pl.BlockSpec((_HEAD_PAD, C), lambda b: (0, 0)),      # head weight
                pl.BlockSpec((_HEAD_PAD, 1), lambda b: (0, 0)),      # head bias
            ],
            out_specs=pl.BlockSpec((1, _HEAD_PAD, 128), lambda b: (b, 0, 0)),
        ),
        compiler_params=pltpu.CompilerParams(
            dimension_semantics=("parallel",),     # v7x: both TCs engaged when B >= 2
            vmem_limit_bytes=48 * 1024 * 1024,
        ),
        cost_estimate=cost,
    )(patches, cw, cb, hw, hb)

    return out[:, :NUM_CLASSES, 0]                     # (B, 6) logits


if __name__ == "__main__":
    key = jax.random.PRNGKey(0)
    kx, kp = jax.random.split(key)
    # Small shapes consistent with the module's (B, 128, 256, 8) contract:
    # (B, H, W, 8) -> monotone image (B, 1, 4H, 2W) = (2, 1, 64, 64).
    x = jax.random.normal(kx, (2, 16, 32, 8), jnp.float32)
    params = init_params(kp)

    out = custom_model_forward(x, params)
    out = jax.block_until_ready(out)
    assert out.shape == (2, NUM_CLASSES)
    print("KERNEL_OK")
</pallas_src>

<mosaic_0001>
module attributes {stable_mosaic.version = 11 : i64} {
  func.func @_fused_conv_pool_head_kernel(%arg0: i32, %arg1: memref<1x9x1024xbf16, #tpu.memory_space<vmem>>, %arg2: memref<32x9xbf16, #tpu.memory_space<vmem>>, %arg3: memref<32x1xf32, #tpu.memory_space<vmem>>, %arg4: memref<8x32xf32, #tpu.memory_space<vmem>>, %arg5: memref<8x1xf32, #tpu.memory_space<vmem>>, %arg6: memref<1x8x128xf32, #tpu.memory_space<vmem>>) attributes {dimension_semantics = [#tpu.dimension_semantics<parallel>], iteration_bounds = array<i64: 2>, scalar_prefetch = 0 : i64, scratch_operands = 0 : i64, tpu.core_type = #tpu.core_type<tc>, window_params = [{transform_indices = @transform_0, window_bounds = array<i64: 1, 9, 1024>}, {pipeline_mode = #tpu.pipeline_mode<synchronous>, transform_indices = @transform_1, window_bounds = array<i64: 32, 9>}, {pipeline_mode = #tpu.pipeline_mode<synchronous>, transform_indices = @transform_2, window_bounds = array<i64: 32, 1>}, {pipeline_mode = #tpu.pipeline_mode<synchronous>, transform_indices = @transform_3, window_bounds = array<i64: 8, 32>}, {pipeline_mode = #tpu.pipeline_mode<synchronous>, transform_indices = @transform_4, window_bounds = array<i64: 8, 1>}, {transform_indices = @transform_5, window_bounds = array<i64: 1, 8, 128>}]} {
    %c0 = arith.constant 0 : index
    %c0_0 = arith.constant 0 : index
    %0 = vector.load %arg2[%c0, %c0_0] : memref<32x9xbf16, #tpu.memory_space<vmem>>, vector<32x9xbf16>
    %c0_1 = arith.constant 0 : index
    %c0_2 = arith.constant 0 : index
    %c0_3 = arith.constant 0 : index
    %1 = vector.load %arg1[%c0_1, %c0_2, %c0_3] : memref<1x9x1024xbf16, #tpu.memory_space<vmem>>, vector<1x9x1024xbf16>
    %2 = vector.shape_cast %1 : vector<1x9x1024xbf16> to vector<9x1024xbf16>
    %cst = arith.constant dense<0.000000e+00> : vector<32x1024xf32>
    %3 = tpu.matmul %0, %2, %cst {dimension_numbers = #tpu.dot_dimension_numbers<[1], [0], [0], [1], [0, 0, 1, 1], [], []>} : vector<32x9xbf16>, vector<9x1024xbf16>, vector<32x1024xf32> -> vector<32x1024xf32>
    %c0_4 = arith.constant 0 : index
    %c0_5 = arith.constant 0 : index
    %4 = vector.load %arg3[%c0_4, %c0_5] : memref<32x1xf32, #tpu.memory_space<vmem>>, vector<32x1xf32>
    %5 = vector.broadcast %4 : vector<32x1xf32> to vector<32x1024xf32>
    %6 = arith.addf %3, %5 : vector<32x1024xf32>
    %cst_6 = arith.constant 0.000000e+00 : f32
    %7 = vector.broadcast %cst_6 : f32 to vector<32x1024xf32>
    %8 = arith.maximumf %6, %7 : vector<32x1024xf32>
    %cst_7 = arith.constant dense<0.000000e+00> : vector<32xf32>
    %9 = vector.multi_reduction <add>, %8, %cst_7 [1] : vector<32x1024xf32> to vector<32xf32>
    %10 = vector.shape_cast %9 : vector<32xf32> to vector<32x1xf32>
    %cst_8 = arith.constant 9.765625E-4 : f32
    %11 = vector.broadcast %cst_8 : f32 to vector<32x1xf32>
    %12 = arith.mulf %10, %11 : vector<32x1xf32>
    %c0_9 = arith.constant 0 : index
    %c0_10 = arith.constant 0 : index
    %13 = vector.load %arg4[%c0_9, %c0_10] : memref<8x32xf32, #tpu.memory_space<vmem>>, vector<8x32xf32>
    %cst_11 = arith.constant dense<0.000000e+00> : vector<8x1xf32>
    %14 = tpu.matmul %13, %12, %cst_11 {dimension_numbers = #tpu.dot_dimension_numbers<[1], [0], [0], [1], [0, 0, 1, 1], [], []>} : vector<8x32xf32>, vector<32x1xf32>, vector<8x1xf32> -> vector<8x1xf32>
    %c0_12 = arith.constant 0 : index
    %c0_13 = arith.constant 0 : index
    %15 = vector.load %arg5[%c0_12, %c0_13] : memref<8x1xf32, #tpu.memory_space<vmem>>, vector<8x1xf32>
    %16 = arith.addf %14, %15 : vector<8x1xf32>
    %17 = vector.shape_cast %16 : vector<8x1xf32> to vector<8x1xf32>
    %18 = vector.broadcast %17 : vector<8x1xf32> to vector<8x128xf32>
    %c0_14 = arith.constant 0 : index
    %c0_15 = arith.constant 0 : index
    %c0_16 = arith.constant 0 : index
    %19 = vector.load %arg6[%c0_14, %c0_15, %c0_16] : memref<1x8x128xf32, #tpu.memory_space<vmem>>, vector<1x8x128xf32>
    %20 = vector.shape_cast %19 : vector<1x8x128xf32> to vector<8x128xf32>
    %21 = vector.shape_cast %18 : vector<8x128xf32> to vector<1x8x128xf32>
    tpu.vector_store %arg6[%c0_14, %c0_15, %c0_16], %21 {strides = array<i32>} : memref<1x8x128xf32, #tpu.memory_space<vmem>>, vector<1x8x128xf32>,
    return
  }
  func.func @transform_0(%arg0: i32) -> (i32, i32, i32) {
    %c0_i32 = arith.constant 0 : i32
    %c0_i32_0 = arith.constant 0 : i32
    %c0_i32_1 = arith.constant 0 : i32
    return %arg0, %c0_i32, %c0_i32_0 : i32, i32, i32
  }
  func.func @transform_1(%arg0: i32) -> (i32, i32) {
    %c0_i32 = arith.constant 0 : i32
    %c0_i32_0 = arith.constant 0 : i32
    %c0_i32_1 = arith.constant 0 : i32
    return %c0_i32, %c0_i32_0 : i32, i32
  }
  func.func @transform_2(%arg0: i32) -> (i32, i32) {
    %c0_i32 = arith.constant 0 : i32
    %c0_i32_0 = arith.constant 0 : i32
    %c0_i32_1 = arith.constant 0 : i32
    return %c0_i32, %c0_i32_0 : i32, i32
  }
  func.func @transform_3(%arg0: i32) -> (i32, i32) {
    %c0_i32 = arith.constant 0 : i32
    %c0_i32_0 = arith.constant 0 : i32
    %c0_i32_1 = arith.constant 0 : i32
    return %c0_i32, %c0_i32_0 : i32, i32
  }
  func.func @transform_4(%arg0: i32) -> (i32, i32) {
    %c0_i32 = arith.constant 0 : i32
    %c0_i32_0 = arith.constant 0 : i32
    %c0_i32_1 = arith.constant 0 : i32
    return %c0_i32, %c0_i32_0 : i32, i32
  }
  func.func @transform_5(%arg0: i32) -> (i32, i32, i32) {
    %c0_i32 = arith.constant 0 : i32
    %c0_i32_0 = arith.constant 0 : i32
    %c0_i32_1 = arith.constant 0 : i32
    return %arg0, %c0_i32, %c0_i32_0 : i32, i32, i32
  }
}

</mosaic_0001>

<llo_original>
// kernel: custom_model_forward.1
$region0: #{custom_model_forward.1}
  #allocation0 [shape = 'u32[]', space=smem, size = 0x4, offset = 0x4, fixed_abs, tag = 'smem constant byte address 0x4 - core index']
  #allocation1 [shape = 'u32[144,128]{1,0:T(1,128)}', space=vmem, size = 0x12000, scoped, tag = 'internal scratch']
  %s0 = inlined_call_operand.vmem [shape: bf16[2,9,1024], index: 0, kind: input, shape index: {}]
  %s1 = inlined_call_operand.vmem [shape: bf16[32,9], index: 1, kind: input, shape index: {}]
  %s2 = inlined_call_operand.vmem [shape: f32[32,1], index: 2, kind: input, shape index: {}]
  %s3 = inlined_call_operand.vmem [shape: f32[8,32], index: 3, kind: input, shape index: {}]
  %s4 = inlined_call_operand.vmem [shape: f32[8,1], index: 4, kind: input, shape index: {}]
  %s5 = inlined_call_operand.vmem [shape: f32[2,8,128], index: 5, kind: output, shape index: {}]
  %s6 = sld [smem:[#allocation0]]
  $region53: #{custom_model_forward.1} parent=0
    _
  %s8 = ssub.s32 1, %s6
  %s9 = scalar_select 0, %s8, %s6
  loop: start=0, step=1, limit=4
  $region2: #{custom_model_forward.1} parent=0 // loop_pre_header
    _
  $region3: #{custom_model_forward.1} parent=0 // loop_header
    %s11 = sphi 0, %s15
    %p12 = scmp.ge.s32.totalorder %s11, 4
    %s21 = sphi 0, %s23
    %s24 = sphi 0, %s21
    %s25 = sphi 0, %s24
    %s41 = sphi 0, %s25
    %s45 = sphi 0, %s45
    %s47 = sphi 0, %s45
    %s48 = sphi 0, %s47
    %s62 = sphi 0, %s48
    %s66 = sphi 0, %s66
    %s68 = sphi 0, %s66
    %s69 = sphi 0, %s68
    %s83 = sphi 0, %s69
    %s87 = sphi 0, %s87
    %s89 = sphi 0, %s87
    %s90 = sphi 0, %s89
    %s104 = sphi 0, %s90
    %s108 = sphi 0, %s108
    %s110 = sphi 0, %s108
    %s111 = sphi 0, %s110
    %s125 = sphi 0, %s111
    %s131 = sphi 0, %s133
    %s134 = sphi 0, %s131
    %s135 = sphi 0, %s134
    %s151 = sphi 0, %s135
  $region4: #{custom_model_forward.1} parent=0 // loop_header_branch
    %14 = sbr.rel (%p12) target = $region8
  $region5: #{custom_model_forward.1} parent=0 // loop_body
    %s16 = ssub.s32 %s11, 1
    %s17 = ssub.s32 %s11, 2
    %s18 = sadd.s32 %s11, 1
    %s19 = ssub.s32 %s11, %s18
    %p20 = scmp.eq.s32.totalorder %s19, 0
    %s22 = sadd.s32 %s21, 1
    %s23 = scalar_select %p20, %s21, %s22
    %p26 = pneg %p20
    %p27 = scmp.eq.s32.totalorder %s11, 1
    %p28 = por %p26, %p27
    %p29 = scmp.ne.s32.totalorder %s21, %s24
    %p30 = scmp.eq.s32.totalorder %s11, 0
    %p31 = por %p29, %p30
    %p32 = scmp.ne.s32.totalorder %s21, %s24
    %p33 = scmp.eq.s32.totalorder %s16, 1
    %p34 = por %p32, %p33
    %p35 = scmp.ne.s32.totalorder %s24, %s25
    %p36 = scmp.eq.s32.totalorder %s16, 0
    %p37 = por %p35, %p36
    %p38 = scmp.ne.s32.totalorder %s24, %s25
    %p39 = scmp.eq.s32.totalorder %s17, 1
    %p40 = por %p38, %p39
    %p42 = scmp.ne.s32.totalorder %s25, %s41
    %p43 = scmp.eq.s32.totalorder %s17, 0
    %p44 = por %p42, %p43
    %s46 = sadd.s32 %s45, 1
    %p49 = scmp.eq.s32.totalorder %s11, 1
    %p50 = scmp.ne.s32.totalorder %s45, %s47
    %p51 = scmp.eq.s32.totalorder %s11, 0
    %p52 = por %p50, %p51
    %p53 = scmp.ne.s32.totalorder %s45, %s47
    %p54 = scmp.eq.s32.totalorder %s16, 1
    %p55 = por %p53, %p54
    %p56 = scmp.ne.s32.totalorder %s47, %s48
    %p57 = scmp.eq.s32.totalorder %s16, 0
    %p58 = por %p56, %p57
    %p59 = scmp.ne.s32.totalorder %s47, %s48
    %p60 = scmp.eq.s32.totalorder %s17, 1
    %p61 = por %p59, %p60
    %p63 = scmp.ne.s32.totalorder %s48, %s62
    %p64 = scmp.eq.s32.totalorder %s17, 0
    %p65 = por %p63, %p64
    %s67 = sadd.s32 %s66, 1
    %p70 = scmp.eq.s32.totalorder %s11, 1
    %p71 = scmp.ne.s32.totalorder %s66, %s68
    %p72 = scmp.eq.s32.totalorder %s11, 0
    %p73 = por %p71, %p72
    %p74 = scmp.ne.s32.totalorder %s66, %s68
    %p75 = scmp.eq.s32.totalorder %s16, 1
    %p76 = por %p74, %p75
    %p77 = scmp.ne.s32.totalorder %s68, %s69
    %p78 = scmp.eq.s32.totalorder %s16, 0
    %p79 = por %p77, %p78
    %p80 = scmp.ne.s32.totalorder %s68, %s69
    %p81 = scmp.eq.s32.totalorder %s17, 1
    %p82 = por %p80, %p81
    %p84 = scmp.ne.s32.totalorder %s69, %s83
    %p85 = scmp.eq.s32.totalorder %s17, 0
    %p86 = por %p84, %p85
    %s88 = sadd.s32 %s87, 1
    %p91 = scmp.eq.s32.totalorder %s11, 1
    %p92 = scmp.ne.s32.totalorder %s87, %s89
    %p93 = scmp.eq.s32.totalorder %s11, 0
    %p94 = por %p92, %p93
    %p95 = scmp.ne.s32.totalorder %s87, %s89
    %p96 = scmp.eq.s32.totalorder %s16, 1
    %p97 = por %p95, %p96
    %p98 = scmp.ne.s32.totalorder %s89, %s90
    %p99 = scmp.eq.s32.totalorder %s16, 0
    %p100 = por %p98, %p99
    %p101 = scmp.ne.s32.totalorder %s89, %s90
    %p102 = scmp.eq.s32.totalorder %s17, 1
    %p103 = por %p101, %p102
    %p105 = scmp.ne.s32.totalorder %s90, %s104
    %p106 = scmp.eq.s32.totalorder %s17, 0
    %p107 = por %p105, %p106
    %s109 = sadd.s32 %s108, 1
    %p112 = scmp.eq.s32.totalorder %s11, 1
    %p113 = scmp.ne.s32.totalorder %s108, %s110
    %p114 = scmp.eq.s32.totalorder %s11, 0
    %p115 = por %p113, %p114
    %p116 = scmp.ne.s32.totalorder %s108, %s110
    %p117 = scmp.eq.s32.totalorder %s16, 1
    %p118 = por %p116, %p117
    %p119 = scmp.ne.s32.totalorder %s110, %s111
    %p120 = scmp.eq.s32.totalorder %s16, 0
    %p121 = por %p119, %p120
    %p122 = scmp.ne.s32.totalorder %s110, %s111
    %p123 = scmp.eq.s32.totalorder %s17, 1
    %p124 = por %p122, %p123
    %p126 = scmp.ne.s32.totalorder %s111, %s125
    %p127 = scmp.eq.s32.totalorder %s17, 0
    %p128 = por %p126, %p127
    %s129 = ssub.s32 %s11, %s18
    %p130 = scmp.eq.s32.totalorder %s129, 0
    %s132 = sadd.s32 %s131, 1
    %s133 = scalar_select %p130, %s131, %s132
    %p136 = pneg %p130
    %p137 = scmp.eq.s32.totalorder %s11, 1
    %p138 = por %p136, %p137
    %p139 = scmp.ne.s32.totalorder %s131, %s134
    %p140 = scmp.eq.s32.totalorder %s11, 0
    %p141 = por %p139, %p140
    %p142 = scmp.ne.s32.totalorder %s131, %s134
    %p143 = scmp.eq.s32.totalorder %s16, 1
    %p144 = por %p142, %p143
    %p145 = scmp.ne.s32.totalorder %s134, %s135
    %p146 = scmp.eq.s32.totalorder %s16, 0
    %p147 = por %p145, %p146
    %p148 = scmp.ne.s32.totalorder %s134, %s135
    %p149 = scmp.eq.s32.totalorder %s17, 1
    %p150 = por %p148, %p149
    %p152 = scmp.ne.s32.totalorder %s135, %s151
    %p153 = scmp.eq.s32.totalorder %s17, 0
    %p154 = por %p152, %p153
    %p155 = scmp.le.s32.totalorder 1, %s11
    %p156 = scmp.lt.s32.totalorder %s11, 3
    %p157 = pnand %p155, %p156
    %p158 = pneg %p157
    // Predicated region
    $region9: #{custom_model_forward.1} parent=5 // pred_check
      _
    $region10: #{custom_model_forward.1} parent=5 // pred_check_branch
      %160 = sbr.rel (%p157) target = $region12
    $region11: #{custom_model_forward.1} parent=5 // pred_region
      %s161 = ssub.s32 %s11, 1
      // Predicated region
      $region13: #{custom_model_forward.1} parent=11 // pred_check
        %p162 = pneg %p58
      $region14: #{custom_model_forward.1} parent=11 // pred_check_branch
        %164 = sbr.rel (%p162) target = $region16
      $region15: #{custom_model_forward.1} parent=11 // pred_region
        _
      $region16: #{custom_model_forward.1} parent=11 // pred_fallthru
        _
      // Predicated region
      $region17: #{custom_model_forward.1} parent=11 // pred_check
        %p165 = pneg %p79
      $region18: #{custom_model_forward.1} parent=11 // pred_check_branch
        %167 = sbr.rel (%p165) target = $region20
      $region19: #{custom_model_forward.1} parent=11 // pred_region
        _
      $region20: #{custom_model_forward.1} parent=11 // pred_fallthru
        _
      // Predicated region
      $region21: #{custom_model_forward.1} parent=11 // pred_check
        %p168 = pneg %p100
      $region22: #{custom_model_forward.1} parent=11 // pred_check_branch
        %170 = sbr.rel (%p168) target = $region24
      $region23: #{custom_model_forward.1} parent=11 // pred_region
        _
      $region24: #{custom_model_forward.1} parent=11 // pred_fallthru
        _
      // Predicated region
      $region25: #{custom_model_forward.1} parent=11 // pred_check
        %p171 = pneg %p121
      $region26: #{custom_model_forward.1} parent=11 // pred_check_branch
        %173 = sbr.rel (%p171) target = $region28
      $region27: #{custom_model_forward.1} parent=11 // pred_region
        _
      $region28: #{custom_model_forward.1} parent=11 // pred_fallthru
        _
    $region12: #{custom_model_forward.1} parent=5 // pred_fallthru
      _
    %p174 = scmp.lt.s32.totalorder %s11, 2
    // Predicated region
    $region29: #{custom_model_forward.1} parent=5 // pred_check
      %p175 = pneg %p174
    $region30: #{custom_model_forward.1} parent=5 // pred_check_branch
      %177 = sbr.rel (%p175) target = $region32
    $region31: #{custom_model_forward.1} parent=5 // pred_region
      // Predicated region
      $region33: #{custom_model_forward.1} parent=31 // pred_check
        %p178 = pneg %p31
      $region34: #{custom_model_forward.1} parent=31 // pred_check_branch
        %180 = sbr.rel (%p178) target = $region36
      $region35: #{custom_model_forward.1} parent=31 // pred_region
        %p181 = scmp.lt.s32.totalorder %s11, 1
        %s182 = scalar_select %p181, %s11, 1
        %s183 = smul.addr %s182, 16
        %s184 = smul.addr %s183, 4
        %s185 = scalar_lea.vmem %s0, %s184
      $region36: #{custom_model_forward.1} parent=31 // pred_fallthru
        _
    $region32: #{custom_model_forward.1} parent=5 // pred_fallthru
      _
    %p186 = scmp.le.s32.totalorder 1, %s11
    %p187 = scmp.lt.s32.totalorder %s11, 3
    %p188 = pnand %p186, %p187
    %p189 = pneg %p188
    // Predicated region
    $region37: #{custom_model_forward.1} parent=5 // pred_check
      _
    $region38: #{custom_model_forward.1} parent=5 // pred_check_branch
      %191 = sbr.rel (%p188) target = $region40
    $region39: #{custom_model_forward.1} parent=5 // pred_region
      %s192 = ssub.s32 %s11, 1
      %p193 = scmp.lt.s32.totalorder %s16, 1
      %s194 = scalar_select %p193, %s16, 1
      %s195 = smul.addr %s194, 16
      %s196 = smul.addr %s195, 4
      %s197 = scalar_lea.vmem %s0, %s196
      %p198 = pneg %p37
      %p199 = pneg %p34
      %p200 = pneg %p58
      %p201 = pneg %p55
      %p202 = pneg %p79
      %p203 = pneg %p76
      %p204 = pneg %p100
      %p205 = pneg %p97
      %p206 = pneg %p121
      %p207 = pneg %p118
      %p208 = pneg %p147
      %p209 = pneg %p144
      %p210 = scmp.lt.s32.totalorder %s16, 1
      %s211 = scalar_select %p210, %s16, 1
      %s212 = smul.addr %s211, 8
      %s213 = scalar_lea.vmem %s5, %s212
      %p214 = scmp.lt.s32.totalorder %s16, 1
      %s215 = scalar_select %p214, %s16, 1
      %s216 = smul.addr %s215, 16
      %s217 = smul.addr %s216, 4
      %s218 = scalar_lea.vmem %s0, %s217
      %p219 = scmp.lt.s32.totalorder %s16, 1
      %s220 = scalar_select %p219, %s16, 1
      %s221 = smul.addr %s220, 8
      %s222 = scalar_lea.vmem %s5, %s221
      %v224 = vld [vmem:[%s1] sm:$0xf]
      %v225 = vld [vmem:[%s1 + $0x4] sm:$0xf]
      %v226 = vld [vmem:[%s1 + $0x8] sm:$0xf]
      %v227 = vld [vmem:[%s1 + $0xc] sm:$0xf]
      %v228 = vld [vmem:[%s218] sm:$0xff]
      %v229 = vld [vmem:[%s218 + $0x8] sm:$0xff]
      %v230 = vld [vmem:[%s218 + $0x10] sm:$0xff]
      %v231 = vld [vmem:[%s218 + $0x18] sm:$0xff]
      %v232 = vld [vmem:[%s218 + $0x20] sm:$0x11]
      %v233 = vld [vmem:[%s218 + $0x28] sm:$0x11]
      %v234 = vld [vmem:[%s218 + $0x30] sm:$0x11]
      %v235 = vld [vmem:[%s218 + $0x38] sm:$0x11]
      %v236 = vld [vmem:[%s2] sm:$0xff]
      %v237 = vld [vmem:[%s2 + $0x8] sm:$0xff]
      %v238 = vld [vmem:[%s2 + $0x10] sm:$0xff]
      %v239 = vld [vmem:[%s2 + $0x18] sm:$0xff]
      %241 = vset.pattern.permute.xlu0 0
      %242 = vperm.xlu0 %241, %v236
      %v243 = vpop.permute.xlu0 %242
      %246 = vset.pattern.permute.xlu0 0
      %247 = vperm.xlu0 %246, %v237
      %v248 = vpop.permute.xlu0 %247
      %251 = vset.pattern.permute.xlu0 0
      %252 = vperm.xlu0 %251, %v238
      %v253 = vpop.permute.xlu0 %252
      %256 = vset.pattern.permute.xlu0 0
      %257 = vperm.xlu0 %256, %v239
      %v258 = vpop.permute.xlu0 %257
      %v264 = vunpack.c.l.b16 %v224
      %v265 = vunpack.c.l.b16 %v225
      %v266 = vunpack.c.l.b16 %v226
      %v267 = vunpack.c.l.b16 %v227
      %v268 = vpack.c.b16 %v265, %v264
      %v269 = vpack.c.b16 %v267, %v266
      %v278 = vunpack.c.l.b16 %v228
      %v279 = vunpack.c.h.b16 %v228
      %v280 = vunpack.c.l.b16 %v229
      %v281 = vunpack.c.h.b16 %v229
      %v282 = vunpack.c.l.b16 %v230
      %v283 = vunpack.c.h.b16 %v230
      %v284 = vunpack.c.l.b16 %v231
      %v285 = vunpack.c.h.b16 %v231
      %v286 = vunpack.c.l.b16 %v232
      %v287 = vunpack.c.h.b16 %v232
      %v288 = vunpack.c.l.b16 %v233
      %v289 = vunpack.c.h.b16 %v233
      %v290 = vunpack.c.l.b16 %v234
      %v291 = vunpack.c.h.b16 %v234
      %v292 = vunpack.c.l.b16 %v235
      %v293 = vunpack.c.h.b16 %v235
      %v294 = vpack.c.b16 %v286, %v278
      %v295 = vpack.c.b16 %v287, %v279
      %v296 = vpack.c.b16 %v288, %v280
      %v297 = vpack.c.b16 %v289, %v281
      %v298 = vpack.c.b16 %v290, %v282
      %v299 = vpack.c.b16 %v291, %v283
      %v300 = vpack.c.b16 %v292, %v284
      %v301 = vpack.c.b16 %v293, %v285
      %vm302 = vcmask 72704
      %v304 = vsel %vm302, %v268, 0
      %v307 = vsel %vm302, %v269, 0
      %vm309 = vcmask 1043456
      %vm310 = vcmask 1044480
      %v311 = vsel %vm309, 4294967295, 65535
      %v312 = vsel %vm310, %v311, 0
      %v314 = vand.u32 %v294, %v312
      %v317 = vand.u32 %v295, %v312
      %v320 = vand.u32 %v296, %v312
      %v323 = vand.u32 %v297, %v312
      %v326 = vand.u32 %v298, %v312
      %v329 = vand.u32 %v299, %v312
      %v332 = vand.u32 %v300, %v312
      %v335 = vand.u32 %v301, %v312
      %337 = vmatprep.subr.bf16.mxu0 %v317
      %338 = vmatpush1.bf16.msra.mxu0 %v314
      %339 = vmatprep.subr.bf16.mxu0 0
      %340 = vmatpush1.bf16.msra.mxu0 0
      %341 = vmatprep.subr.bf16.mxu0 0
      %342 = vmatpush1.bf16.msra.mxu0 0
      %343 = vmatprep.subr.bf16.mxu0 0
      %344 = vmatpush1.bf16.msra.mxu0 0
      %345 = vmatprep.subr.bf16.mxu0 0
      %346 = vmatpush1.bf16.msra.mxu0 0
      %347 = vmatprep.subr.bf16.mxu0 0
      %348 = vmatpush1.bf16.msra.mxu0 0
      %349 = vmatprep.subr.bf16.mxu0 0
      %350 = vmatpush1.bf16.msra.mxu0 0
      %351 = vmatprep.subr.bf16.mxu0 0
      %352 = vmatpush1.bf16.msra.mxu0 0
      %353 = vmatprep.subr.bf16.mxu0 0
      %354 = vmatpush1.bf16.msra.mxu0 0
      %355 = vmatprep.subr.bf16.mxu0 0
      %356 = vmatpush1.bf16.msra.mxu0 0
      %357 = vmatprep.subr.bf16.mxu0 0
      %358 = vmatpush1.bf16.msra.mxu0 0
      %359 = vmatprep.subr.bf16.mxu0 0
      %360 = vmatpush1.bf16.msra.mxu0 0
      %361 = vmatprep.subr.bf16.mxu0 0
      %362 = vmatpush1.bf16.msra.mxu0 0
      %363 = vmatprep.subr.bf16.mxu0 0
      %364 = vmatpush1.bf16.msra.mxu0 0
      %365 = vmatprep.subr.bf16.mxu0 0
      %366 = vmatpush1.bf16.msra.mxu0 0
      %367 = vmatprep.subr.bf16.mxu0 0
      %368 = vmatpush1.bf16.msra.mxu0 0
      %369 = vmatprep.mubr.bf16.mxu0 0
      %370 = vmatmul.mubr.bf16.gmra.mrb[0].mxu0 %v304
      %v371 = vpop.f32.mrb[0].mxu0
      %v372 = vadd.f32 %v243, %v371
      %v373 = vpop.f32.mrb[0].mxu0
      %v374 = vadd.f32 %v243, %v373
      %v375 = vpop.f32.mrb[0].mxu0
      %v376 = vadd.f32 %v248, %v375
      %v377 = vpop.f32.mrb[0].mxu0
      %v378 = vadd.f32 %v248, %v377
      %379 = vmatprep.mubr.bf16.mxu0 0
      %380 = vmatmul.mubr.bf16.gmra.mrb[0].mxu0 %v307
      %v381 = vpop.f32.mrb[0].mxu0
      %v382 = vadd.f32 %v253, %v381
      %v383 = vpop.f32.mrb[0].mxu0
      %v384 = vadd.f32 %v253, %v383
      %v385 = vpop.f32.mrb[0].mxu0
      %v386 = vadd.f32 %v258, %v385
      %v387 = vpop.f32.mrb[0].mxu0
      %v388 = vadd.f32 %v258, %v387
      %389 = vdwg.mxu0
      %390 = vmatprep.subr.bf16.mxu0 %v323
      %391 = vmatpush1.bf16.msra.mxu0 %v320
      %392 = vmatprep.subr.bf16.mxu0 0
      %393 = vmatpush1.bf16.msra.mxu0 0
      %394 = vmatprep.subr.bf16.mxu0 0
      %395 = vmatpush1.bf16.msra.mxu0 0
      %396 = vmatprep.subr.bf16.mxu0 0
      %397 = vmatpush1.bf16.msra.mxu0 0
      %398 = vmatprep.subr.bf16.mxu0 0
      %399 = vmatpush1.bf16.msra.mxu0 0
      %400 = vmatprep.subr.bf16.mxu0 0
      %401 = vmatpush1.bf16.msra.mxu0 0
      %402 = vmatprep.subr.bf16.mxu0 0
      %403 = vmatpush1.bf16.msra.mxu0 0
      %404 = vmatprep.subr.bf16.mxu0 0
      %405 = vmatpush1.bf16.msra.mxu0 0
      %406 = vmatprep.subr.bf16.mxu0 0
      %407 = vmatpush1.bf16.msra.mxu0 0
      %408 = vmatprep.subr.bf16.mxu0 0
      %409 = vmatpush1.bf16.msra.mxu0 0
      %410 = vmatprep.subr.bf16.mxu0 0
      %411 = vmatpush1.bf16.msra.mxu0 0
      %412 = vmatprep.subr.bf16.mxu0 0
      %413 = vmatpush1.bf16.msra.mxu0 0
      %414 = vmatprep.subr.bf16.mxu0 0
      %415 = vmatpush1.bf16.msra.mxu0 0
      %416 = vmatprep.subr.bf16.mxu0 0
      %417 = vmatpush1.bf16.msra.mxu0 0
      %418 = vmatprep.subr.bf16.mxu0 0
      %419 = vmatpush1.bf16.msra.mxu0 0
      %420 = vmatprep.subr.bf16.mxu0 0
      %421 = vmatpush1.bf16.msra.mxu0 0
      %422 = vmatprep.mubr.bf16.mxu0 0
      %423 = vmatmul.mubr.bf16.gmra.mrb[0].mxu0 %v304
      %v424 = vpop.f32.mrb[0].mxu0
      %v425 = vadd.f32 %v243, %v424
      %v426 = vpop.f32.mrb[0].mxu0
      %v427 = vadd.f32 %v243, %v426
      %v428 = vpop.f32.mrb[0].mxu0
      %v429 = vadd.f32 %v248, %v428
      %v430 = vpop.f32.mrb[0].mxu0
      %v431 = vadd.f32 %v248, %v430
      %432 = vmatprep.mubr.bf16.mxu0 0
      %433 = vmatmul.mubr.bf16.gmra.mrb[0].mxu0 %v307
      %v434 = vpop.f32.mrb[0].mxu0
      %v435 = vadd.f32 %v253, %v434
      %v436 = vpop.f32.mrb[0].mxu0
      %v437 = vadd.f32 %v253, %v436
      %v438 = vpop.f32.mrb[0].mxu0
      %v439 = vadd.f32 %v258, %v438
      %v440 = vpop.f32.mrb[0].mxu0
      %v441 = vadd.f32 %v258, %v440
      %442 = vdwg.mxu0
      %443 = vmatprep.subr.bf16.mxu0 %v329
      %444 = vmatpush1.bf16.msra.mxu0 %v326
      %445 = vmatprep.subr.bf16.mxu0 0
      %446 = vmatpush1.bf16.msra.mxu0 0
      %447 = vmatprep.subr.bf16.mxu0 0
      %448 = vmatpush1.bf16.msra.mxu0 0
      %449 = vmatprep.subr.bf16.mxu0 0
      %450 = vmatpush1.bf16.msra.mxu0 0
      %451 = vmatprep.subr.bf16.mxu0 0
      %452 = vmatpush1.bf16.msra.mxu0 0
      %453 = vmatprep.subr.bf16.mxu0 0
      %454 = vmatpush1.bf16.msra.mxu0 0
      %455 = vmatprep.subr.bf16.mxu0 0
      %456 = vmatpush1.bf16.msra.mxu0 0
      %457 = vmatprep.subr.bf16.mxu0 0
      %458 = vmatpush1.bf16.msra.mxu0 0
      %459 = vmatprep.subr.bf16.mxu0 0
      %460 = vmatpush1.bf16.msra.mxu0 0
      %461 = vmatprep.subr.bf16.mxu0 0
      %462 = vmatpush1.bf16.msra.mxu0 0
      %463 = vmatprep.subr.bf16.mxu0 0
      %464 = vmatpush1.bf16.msra.mxu0 0
      %465 = vmatprep.subr.bf16.mxu0 0
      %466 = vmatpush1.bf16.msra.mxu0 0
      %467 = vmatprep.subr.bf16.mxu0 0
      %468 = vmatpush1.bf16.msra.mxu0 0
      %469 = vmatprep.subr.bf16.mxu0 0
      %470 = vmatpush1.bf16.msra.mxu0 0
      %471 = vmatprep.subr.bf16.mxu0 0
      %472 = vmatpush1.bf16.msra.mxu0 0
      %473 = vmatprep.subr.bf16.mxu0 0
      %474 = vmatpush1.bf16.msra.mxu0 0
      %475 = vmatprep.mubr.bf16.mxu0 0
      %476 = vmatmul.mubr.bf16.gmra.mrb[0].mxu0 %v304
      %v477 = vpop.f32.mrb[0].mxu0
      %v478 = vadd.f32 %v243, %v477
      %v479 = vpop.f32.mrb[0].mxu0
      %v480 = vadd.f32 %v243, %v479
      %v481 = vpop.f32.mrb[0].mxu0
      %v482 = vadd.f32 %v248, %v481
      %v483 = vpop.f32.mrb[0].mxu0
      %v484 = vadd.f32 %v248, %v483
      %485 = vmatprep.mubr.bf16.mxu0 0
      %486 = vmatmul.mubr.bf16.gmra.mrb[0].mxu0 %v307
      %v487 = vpop.f32.mrb[0].mxu0
      %v488 = vadd.f32 %v253, %v487
      %v489 = vpop.f32.mrb[0].mxu0
      %v490 = vadd.f32 %v253, %v489
      %v491 = vpop.f32.mrb[0].mxu0
      %v492 = vadd.f32 %v258, %v491
      %v493 = vpop.f32.mrb[0].mxu0
      %v494 = vadd.f32 %v258, %v493
      %495 = vdwg.mxu0
      %496 = vmatprep.subr.bf16.mxu0 %v335
      %497 = vmatpush1.bf16.msra.mxu0 %v332
      %498 = vmatprep.subr.bf16.mxu0 0
      %499 = vmatpush1.bf16.msra.mxu0 0
      %500 = vmatprep.subr.bf16.mxu0 0
      %501 = vmatpush1.bf16.msra.mxu0 0
      %502 = vmatprep.subr.bf16.mxu0 0
      %503 = vmatpush1.bf16.msra.mxu0 0
      %504 = vmatprep.subr.bf16.mxu0 0
      %505 = vmatpush1.bf16.msra.mxu0 0
      %506 = vmatprep.subr.bf16.mxu0 0
      %507 = vmatpush1.bf16.msra.mxu0 0
      %508 = vmatprep.subr.bf16.mxu0 0
      %509 = vmatpush1.bf16.msra.mxu0 0
      %510 = vmatprep.subr.bf16.mxu0 0
      %511 = vmatpush1.bf16.msra.mxu0 0
      %512 = vmatprep.subr.bf16.mxu0 0
      %513 = vmatpush1.bf16.msra.mxu0 0
      %514 = vmatprep.subr.bf16.mxu0 0
      %515 = vmatpush1.bf16.msra.mxu0 0
      %516 = vmatprep.subr.bf16.mxu0 0
      %517 = vmatpush1.bf16.msra.mxu0 0
      %518 = vmatprep.subr.bf16.mxu0 0
      %519 = vmatpush1.bf16.msra.mxu0 0
      %520 = vmatprep.subr.bf16.mxu0 0
      %521 = vmatpush1.bf16.msra.mxu0 0
      %522 = vmatprep.subr.bf16.mxu0 0
      %523 = vmatpush1.bf16.msra.mxu0 0
      %524 = vmatprep.subr.bf16.mxu0 0
      %525 = vmatpush1.bf16.msra.mxu0 0
      %526 = vmatprep.subr.bf16.mxu0 0
      %527 = vmatpush1.bf16.msra.mxu0 0
      %528 = vmatprep.mubr.bf16.mxu0 0
      %529 = vmatmul.mubr.bf16.gmra.mrb[0].mxu0 %v304
      %v530 = vpop.f32.mrb[0].mxu0
      %v531 = vadd.f32 %v243, %v530
      %v532 = vpop.f32.mrb[0].mxu0
      %v533 = vadd.f32 %v243, %v532
      %v534 = vpop.f32.mrb[0].mxu0
      %v535 = vadd.f32 %v248, %v534
      %v536 = vpop.f32.mrb[0].mxu0
      %v537 = vadd.f32 %v248, %v536
      %538 = vmatprep.mubr.bf16.mxu0 0
      %539 = vmatmul.mubr.bf16.gmra.mrb[0].mxu0 %v307
      %v540 = vpop.f32.mrb[0].mxu0
      %v541 = vadd.f32 %v253, %v540
      %v542 = vpop.f32.mrb[0].mxu0
      %v543 = vadd.f32 %v253, %v542
      %v544 = vpop.f32.mrb[0].mxu0
      %v545 = vadd.f32 %v258, %v544
      %v546 = vpop.f32.mrb[0].mxu0
      %v547 = vadd.f32 %v258, %v546
      %548 = vdwg.mxu0
      %v549 = vmax.f32 %v372, 0.0
      %v550 = vmax.f32 %v374, 0.0
      %v551 = vmax.f32 %v425, 0.0
      %v552 = vmax.f32 %v427, 0.0
      %v553 = vmax.f32 %v478, 0.0
      %v554 = vmax.f32 %v480, 0.0
      %v555 = vmax.f32 %v531, 0.0
      %v556 = vmax.f32 %v533, 0.0
      %v557 = vmax.f32 %v376, 0.0
      %v558 = vmax.f32 %v378, 0.0
      %v559 = vmax.f32 %v429, 0.0
      %v560 = vmax.f32 %v431, 0.0
      %v561 = vmax.f32 %v482, 0.0
      %v562 = vmax.f32 %v484, 0.0
      %v563 = vmax.f32 %v535, 0.0
      %v564 = vmax.f32 %v537, 0.0
      %v565 = vmax.f32 %v382, 0.0
      %v566 = vmax.f32 %v384, 0.0
      %v567 = vmax.f32 %v435, 0.0
      %v568 = vmax.f32 %v437, 0.0
      %v569 = vmax.f32 %v488, 0.0
      %v570 = vmax.f32 %v490, 0.0
      %v571 = vmax.f32 %v541, 0.0
      %v572 = vmax.f32 %v543, 0.0
      %v573 = vmax.f32 %v386, 0.0
      %v574 = vmax.f32 %v388, 0.0
      %v575 = vmax.f32 %v439, 0.0
      %v576 = vmax.f32 %v441, 0.0
      %v577 = vmax.f32 %v492, 0.0
      %v578 = vmax.f32 %v494, 0.0
      %v579 = vmax.f32 %v545, 0.0
      %v580 = vmax.f32 %v547, 0.0
      %v581 = vadd.f32 %v549, %v550
      %v582 = vadd.f32 %v581, %v551
      %v583 = vadd.f32 %v582, %v552
      %v584 = vadd.f32 %v583, %v553
      %v585 = vadd.f32 %v584, %v554
      %v586 = vadd.f32 %v585, %v555
      %v587 = vadd.f32 %v586, %v556
      %588 = vadd.xlane.f32.xlu0 %v587
      %v589 = vpop.xlane.xlu0 %588
      %v590 = vadd.f32 %v557, %v558
      %v591 = vadd.f32 %v590, %v559
      %v592 = vadd.f32 %v591, %v560
      %v593 = vadd.f32 %v592, %v561
      %v594 = vadd.f32 %v593, %v562
      %v595 = vadd.f32 %v594, %v563
      %v596 = vadd.f32 %v595, %v564
      %597 = vadd.xlane.f32.xlu0 %v596
      %v598 = vpop.xlane.xlu0 %597
      %v599 = vadd.f32 %v565, %v566
      %v600 = vadd.f32 %v599, %v567
      %v601 = vadd.f32 %v600, %v568
      %v602 = vadd.f32 %v601, %v569
      %v603 = vadd.f32 %v602, %v570
      %v604 = vadd.f32 %v603, %v571
      %v605 = vadd.f32 %v604, %v572
      %606 = vadd.xlane.f32.xlu0 %v605
      %v607 = vpop.xlane.xlu0 %606
      %v608 = vadd.f32 %v573, %v574
      %v609 = vadd.f32 %v608, %v575
      %v610 = vadd.f32 %v609, %v576
      %v611 = vadd.f32 %v610, %v577
      %v612 = vadd.f32 %v611, %v578
      %v613 = vadd.f32 %v612, %v579
      %v614 = vadd.f32 %v613, %v580
      %615 = vadd.xlane.f32.xlu0 %v614
      %v616 = vpop.xlane.xlu0 %615
      %v617 = vmul.f32 %v589, 0.0009765625
      %v618 = vmul.f32 %v598, 0.0009765625
      %v619 = vmul.f32 %v607, 0.0009765625
      %v620 = vmul.f32 %v616, 0.0009765625
      %v621 = vld [vmem:[%s3] sm:$0xff]
      %v622 = vld [vmem:[%s4] sm:$0xff]
      %vm623 = vcmask 261120
      %v625 = vsel %vm623, %v621, 0
      %627 = vmatprep.subr.mxu0 0.0
      %628 = vmatpush1.msra.mxu0 %v617
      %629 = vmatprep.subr.mxu0 0.0
      %630 = vmatpush1.msra.mxu0 %v618
      %631 = vmatprep.subr.mxu0 0.0
      %632 = vmatpush1.msra.mxu0 %v619
      %633 = vmatprep.subr.mxu0 0.0
      %634 = vmatpush1.msra.mxu0 %v620
      %635 = vmatprep.subr.mxu0 0.0
      %636 = vmatpush1.msra.mxu0 0.0
      %637 = vmatprep.subr.mxu0 0.0
      %638 = vmatpush1.msra.mxu0 0.0
      %639 = vmatprep.subr.mxu0 0.0
      %640 = vmatpush1.msra.mxu0 0.0
      %641 = vmatprep.subr.mxu0 0.0
      %642 = vmatpush1.msra.mxu0 0.0
      %643 = vmatprep.subr.mxu0 0.0
      %644 = vmatpush1.msra.mxu0 0.0
      %645 = vmatprep.subr.mxu0 0.0
      %646 = vmatpush1.msra.mxu0 0.0
      %647 = vmatprep.subr.mxu0 0.0
      %648 = vmatpush1.msra.mxu0 0.0
      %649 = vmatprep.subr.mxu0 0.0
      %650 = vmatpush1.msra.mxu0 0.0
      %651 = vmatprep.subr.mxu0 0.0
      %652 = vmatpush1.msra.mxu0 0.0
      %653 = vmatprep.subr.mxu0 0.0
      %654 = vmatpush1.msra.mxu0 0.0
      %655 = vmatprep.subr.mxu0 0.0
      %656 = vmatpush1.msra.mxu0 0.0
      %657 = vmatprep.subr.mxu0 0.0
      %658 = vmatpush1.msra.mxu0 0.0
      %659 = vmatprep.subr.mxu0 0.0
      %660 = vmatpush1.msra.mxu0 0.0
      %661 = vmatprep.subr.mxu0 0.0
      %662 = vmatpush1.msra.mxu0 0.0
      %663 = vmatprep.subr.mxu0 0.0
      %664 = vmatpush1.msra.mxu0 0.0
      %665 = vmatprep.subr.mxu0 0.0
      %666 = vmatpush1.msra.mxu0 0.0
      %667 = vmatprep.subr.mxu0 0.0
      %668 = vmatpush1.msra.mxu0 0.0
      %669 = vmatprep.subr.mxu0 0.0
      %670 = vmatpush1.msra.mxu0 0.0
      %671 = vmatprep.subr.mxu0 0.0
      %672 = vmatpush1.msra.mxu0 0.0
      %673 = vmatprep.subr.mxu0 0.0
      %674 = vmatpush1.msra.mxu0 0.0
      %675 = vmatprep.subr.mxu0 0.0
      %676 = vmatpush1.msra.mxu0 0.0
      %677 = vmatprep.subr.mxu0 0.0
      %678 = vmatpush1.msra.mxu0 0.0
      %679 = vmatprep.subr.mxu0 0.0
      %680 = vmatpush1.msra.mxu0 0.0
      %681 = vmatprep.subr.mxu0 0.0
      %682 = vmatpush1.msra.mxu0 0.0
      %683 = vmatprep.subr.mxu0 0.0
      %684 = vmatpush1.msra.mxu0 0.0
      %685 = vmatprep.subr.mxu0 0.0
      %686 = vmatpush1.msra.mxu0 0.0
      %687 = vmatprep.subr.mxu0 0.0
      %688 = vmatpush1.msra.mxu0 0.0
      %689 = vmatprep.subr.mxu0 0.0
      %690 = vmatpush1.msra.mxu0 0.0
      %691 = vmatprep.mubr.f32.mxu0 0.0
      %692 = vmatmul.mubr.f32.gmra.mrb[0].mxu0 %v625
      %v693 = vpop.f32.mrb[0].mxu0
      %v694 = vadd.f32 %v622, %v693
      %v695 = vpop.f32.mrb[0].mxu0
      %696 = vdwg.mxu0
      %698 = vset.pattern.permute.xlu0 0
      %699 = vperm.xlu0 %698, %v694
      %v700 = vpop.permute.xlu0 %699
      %702 = vst [vmem:[%s222] sm:$0xff] %v700
      %p703 = scmp.lt.s32.totalorder %s16, 1
      %s704 = scalar_select %p703, %s16, 1
      %s705 = smul.addr %s704, 8
      %s706 = scalar_lea.vmem %s5, %s705
      // Predicated region
      $region41: #{custom_model_forward.1} parent=39 // pred_check
        %p707 = pneg %p144
      $region42: #{custom_model_forward.1} parent=39 // pred_check_branch
        %709 = sbr.rel (%p707) target = $region44
      $region43: #{custom_model_forward.1} parent=39 // pred_region
        _
      $region44: #{custom_model_forward.1} parent=39 // pred_fallthru
        _
    $region40: #{custom_model_forward.1} parent=5 // pred_fallthru
      _
    %p710 = scmp.le.s32.totalorder 2, %s11
    // Predicated region
    $region45: #{custom_model_forward.1} parent=5 // pred_check
      %p711 = pneg %p710
    $region46: #{custom_model_forward.1} parent=5 // pred_check_branch
      %713 = sbr.rel (%p711) target = $region48
    $region47: #{custom_model_forward.1} parent=5 // pred_region
      %s714 = ssub.s32 %s11, 2
      // Predicated region
      $region49: #{custom_model_forward.1} parent=47 // pred_check
        %p715 = pneg %p150
      $region50: #{custom_model_forward.1} parent=47 // pred_check_branch
        %717 = sbr.rel (%p715) target = $region52
      $region51: #{custom_model_forward.1} parent=47 // pred_region
        %p718 = scmp.lt.s32.totalorder %s17, 1
        %s719 = scalar_select %p718, %s17, 1
        %s720 = smul.addr %s719, 8
        %s721 = scalar_lea.vmem %s5, %s720
      $region52: #{custom_model_forward.1} parent=47 // pred_fallthru
        _
    $region48: #{custom_model_forward.1} parent=5 // pred_fallthru
      _
  $region6: #{custom_model_forward.1} parent=0 // loop_footer
    %s15 = sadd.s32 1, %s11
  $region7: #{custom_model_forward.1} parent=0 // loop_footer_branch
    %10 = sbr.rel target = $region3
  $region8: #{custom_model_forward.1} parent=0 // loop_exit
    _

</llo_original>
